<compile_context>
chip_gen: v5e
topology: v5e:2x2
jax: 0.10.0
libtpu: 0.0.40
codegen_flags: <defaults>
</compile_context>

<pallas_src>
import functools

import jax
import jax.numpy as jnp
from jax.experimental import pallas as pl
from jax.experimental.pallas import tpu as pltpu


def _round_up(x, m):
    return ((x + m - 1) // m) * m


def _planar_kernel(scalars_ref, z_ref, w_ref, u_ref, fz_ref, ldj_ref):
    b = scalars_ref[0]        # bias (scalar, SMEM)
    wtu = scalars_ref[1]      # w · u_hat (scalar, SMEM, precomputed in wrapper)

    z = z_ref[...]            # (TB, D) f32
    w = w_ref[...]            # (1, D)  f32
    u = u_ref[...]            # (1, D)  f32 (already the "normalized" u)

    # wzb = z @ w^T + b  -> (TB, 1): lane (XLU) reduction; MXU is pure latency at
    # these shapes, and the XLU/EUP work overlaps the VPU multiply-adds below.
    wzb = jnp.sum(z * w, axis=-1, keepdims=True) + b
    t = jnp.tanh(wzb)                                   # h(wzb), EUP

    # fz = z + u_hat * h(wzb)
    fz_ref[...] = (z + u * t).astype(fz_ref.dtype)

    # det = 1 + psi @ u_hat^T = 1 + h'(wzb) * (w · u_hat)
    det = 1.0 + (1.0 - t * t) * wtu
    ldj_ref[...] = jnp.log(jnp.abs(det) + 1e-6).astype(ldj_ref.dtype)


@functools.partial(jax.jit, static_argnames=("block_rows",))
def planar_forward(z, w, u, b, *, block_rows=512):
    """z: (B, D); w, u: (1, D); b: (1,). Returns (fz (B, D), ldj (B, 1))."""
    B, D = z.shape
    out_dtype = z.dtype

    zf = z.astype(jnp.float32)
    wf = w.astype(jnp.float32).reshape(1, D)
    uf = u.astype(jnp.float32).reshape(1, D)
    bf = b.astype(jnp.float32).reshape(())

    # normalized_u (invertibility condition) — scalar parameter glue in JAX.
    wtu = jnp.sum(wf * uf)                               # w @ u^T  (scalar)
    m_wtu = -1.0 + jax.nn.softplus(wtu)                  # stable -1 + log(1 + e^x)
    u_hat = uf + (m_wtu - wtu) * (wf / jnp.linalg.norm(wf))

    # Loop-invariant scalar used by every tile: w · u_hat (hoisted out of kernel).
    wtu_hat = jnp.sum(wf * u_hat)
    scalars = jnp.stack([bf, wtu_hat]).astype(jnp.float32)   # (2,) -> SMEM

    # Batch tiling (rows per tile must be a multiple of 8 when tiled).
    tb = min(block_rows, _round_up(B, 8))
    b_pad = _round_up(B, tb)
    if b_pad != B:
        zf = jnp.pad(zf, ((0, b_pad - B), (0, 0)))
    num_tiles = b_pad // tb

    cost = pl.CostEstimate(
        flops=6 * b_pad * D,
        transcendentals=2 * b_pad,
        bytes_accessed=4 * (2 * b_pad * D + b_pad + 2 * D + 2),
    )

    fz, ldj = pl.pallas_call(
        _planar_kernel,
        out_shape=(
            jax.ShapeDtypeStruct((b_pad, D), out_dtype),
            jax.ShapeDtypeStruct((b_pad, 1), out_dtype),
        ),
        grid=(num_tiles,),
        in_specs=[
            pl.BlockSpec(memory_space=pltpu.MemorySpace.SMEM),   # (b, w·u_hat)
            pl.BlockSpec((tb, D), lambda i: (i, 0)),             # z tile
            pl.BlockSpec((1, D), lambda i: (0, 0)),              # w (resident)
            pl.BlockSpec((1, D), lambda i: (0, 0)),              # u_hat (resident)
        ],
        out_specs=(
            pl.BlockSpec((tb, D), lambda i: (i, 0)),             # fz tile
            pl.BlockSpec((tb, 1), lambda i: (i, 0)),             # ldj tile
        ),
        compiler_params=pltpu.CompilerParams(
            dimension_semantics=("parallel",)),
        cost_estimate=cost,
    )(scalars, zf, wf, u_hat)

    # accumulating_ldj = 0 in the non-tuple input case of the PyTorch module.
    return fz[:B], ldj[:B]


def planar_reference(z, w, u, b):
    """Pure-JAX reference mirroring the PyTorch module."""
    wtu = jnp.sum(w * u)
    m_wtu = -1.0 + jnp.log1p(jnp.exp(wtu))
    u_hat = u + (m_wtu - wtu) * (w / jnp.linalg.norm(w))
    wzb = z @ w.T + b                              # (B, 1)
    psi = (1.0 - jnp.tanh(wzb) ** 2) @ w           # (B, D)
    det = 1.0 + psi @ u_hat.T                      # (B, 1)
    ldj = jnp.log(jnp.abs(det) + 1e-6)
    fz = z + u_hat * jnp.tanh(wzb)
    return fz, ldj


if __name__ == "__main__":
    key = jax.random.PRNGKey(0)
    k_z, k_u, k_w, k_z2 = jax.random.split(key, 4)

    B, D = 8, 32                      # batch=8, size=32
    init_sigma = 0.01

    z = jax.random.normal(k_z, (B, D), dtype=jnp.float32)
    u = init_sigma * jax.random.normal(k_u, (1, D), dtype=jnp.float32)
    w = init_sigma * jax.random.normal(k_w, (1, D), dtype=jnp.float32)
    b = jnp.zeros((1,), dtype=jnp.float32)

    fz, ldj = planar_forward(z, w, u, b)
    jax.block_until_ready((fz, ldj))
    fz_ref, ldj_ref = planar_reference(z, w, u, b)
    assert jnp.allclose(fz, fz_ref, atol=1e-5, rtol=1e-5)
    assert jnp.allclose(ldj, ldj_ref, atol=1e-5, rtol=1e-5)

    # Exercise the multi-tile / padded-batch path (batch not a multiple of 512).
    B2 = 1040
    z2 = jax.random.normal(k_z2, (B2, D), dtype=jnp.float32)
    fz2, ldj2 = planar_forward(z2, w, u, b)
    jax.block_until_ready((fz2, ldj2))
    fz2_ref, ldj2_ref = planar_reference(z2, w, u, b)
    assert jnp.allclose(fz2, fz2_ref, atol=1e-5, rtol=1e-5)
    assert jnp.allclose(ldj2, ldj2_ref, atol=1e-5, rtol=1e-5)

    print("KERNEL_OK")
</pallas_src>

<mosaic_0001>
module attributes {stable_mosaic.version = 11 : i64} {
  func.func @_planar_kernel(%arg0: i32, %arg1: memref<2xf32, #tpu.memory_space<smem>>, %arg2: memref<8x32xf32, #tpu.memory_space<vmem>>, %arg3: memref<1x32xf32, #tpu.memory_space<vmem>>, %arg4: memref<1x32xf32, #tpu.memory_space<vmem>>, %arg5: memref<8x32xf32, #tpu.memory_space<vmem>>, %arg6: memref<8x1xf32, #tpu.memory_space<vmem>>) attributes {dimension_semantics = [#tpu.dimension_semantics<parallel>], iteration_bounds = array<i64: 1>, scalar_prefetch = 0 : i64, scratch_operands = 0 : i64, tpu.core_type = #tpu.core_type<tc>, window_params = [{transform_indices = @transform_0, window_bounds = array<i64: 2>}, {transform_indices = @transform_1, window_bounds = array<i64: 8, 32>}, {pipeline_mode = #tpu.pipeline_mode<synchronous>, transform_indices = @transform_2, window_bounds = array<i64: 1, 32>}, {pipeline_mode = #tpu.pipeline_mode<synchronous>, transform_indices = @transform_3, window_bounds = array<i64: 1, 32>}, {transform_indices = @transform_4, window_bounds = array<i64: 8, 32>}, {transform_indices = @transform_5, window_bounds = array<i64: 8, 1>}]} {
    %c0 = arith.constant 0 : index
    %0 = memref.load %arg1[%c0] : memref<2xf32, #tpu.memory_space<smem>>
    %c1 = arith.constant 1 : index
    %1 = memref.load %arg1[%c1] : memref<2xf32, #tpu.memory_space<smem>>
    %c0_0 = arith.constant 0 : index
    %c0_1 = arith.constant 0 : index
    %2 = vector.load %arg2[%c0_0, %c0_1] : memref<8x32xf32, #tpu.memory_space<vmem>>, vector<8x32xf32>
    %c0_2 = arith.constant 0 : index
    %c0_3 = arith.constant 0 : index
    %3 = vector.load %arg3[%c0_2, %c0_3] : memref<1x32xf32, #tpu.memory_space<vmem>>, vector<1x32xf32>
    %c0_4 = arith.constant 0 : index
    %c0_5 = arith.constant 0 : index
    %4 = vector.load %arg4[%c0_4, %c0_5] : memref<1x32xf32, #tpu.memory_space<vmem>>, vector<1x32xf32>
    %5 = vector.broadcast %3 : vector<1x32xf32> to vector<8x32xf32>
    %6 = arith.mulf %2, %5 : vector<8x32xf32>
    %cst = arith.constant dense<0.000000e+00> : vector<8xf32>
    %7 = vector.multi_reduction <add>, %6, %cst [1] : vector<8x32xf32> to vector<8xf32>
    %8 = vector.shape_cast %7 : vector<8xf32> to vector<8x1xf32>
    %9 = vector.broadcast %0 : f32 to vector<8x1xf32>
    %10 = arith.addf %8, %9 : vector<8x1xf32>
    %11 = math.tanh %10 : vector<8x1xf32>
    %12 = vector.broadcast %4 : vector<1x32xf32> to vector<8x32xf32>
    %13 = vector.broadcast %11 : vector<8x1xf32> to vector<8x32xf32>
    %14 = arith.mulf %12, %13 : vector<8x32xf32>
    %15 = arith.addf %2, %14 : vector<8x32xf32>
    %c0_6 = arith.constant 0 : index
    %c0_7 = arith.constant 0 : index
    %16 = vector.load %arg5[%c0_6, %c0_7] : memref<8x32xf32, #tpu.memory_space<vmem>>, vector<8x32xf32>
    tpu.vector_store %arg5[%c0_6, %c0_7], %15 {strides = array<i32>} : memref<8x32xf32, #tpu.memory_space<vmem>>, vector<8x32xf32>,
    %17 = arith.mulf %11, %11 : vector<8x1xf32>
    %cst_8 = arith.constant 1.000000e+00 : f32
    %18 = vector.broadcast %cst_8 : f32 to vector<8x1xf32>
    %19 = arith.subf %18, %17 : vector<8x1xf32>
    %20 = vector.broadcast %1 : f32 to vector<8x1xf32>
    %21 = arith.mulf %19, %20 : vector<8x1xf32>
    %cst_9 = arith.constant 1.000000e+00 : f32
    %22 = vector.broadcast %cst_9 : f32 to vector<8x1xf32>
    %23 = arith.addf %22, %21 : vector<8x1xf32>
    %24 = math.absf %23 : vector<8x1xf32>
    %cst_10 = arith.constant 9.99999997E-7 : f32
    %25 = vector.broadcast %cst_10 : f32 to vector<8x1xf32>
    %26 = arith.addf %24, %25 : vector<8x1xf32>
    %27 = math.log %26 : vector<8x1xf32>
    %c0_11 = arith.constant 0 : index
    %c0_12 = arith.constant 0 : index
    %28 = vector.load %arg6[%c0_11, %c0_12] : memref<8x1xf32, #tpu.memory_space<vmem>>, vector<8x1xf32>
    tpu.vector_store %arg6[%c0_11, %c0_12], %27 {strides = array<i32>} : memref<8x1xf32, #tpu.memory_space<vmem>>, vector<8x1xf32>,
    return
  }
  func.func @transform_0(%arg0: i32) -> i32 {
    %c0_i32 = arith.constant 0 : i32
    %c0_i32_0 = arith.constant 0 : i32
    return %c0_i32 : i32
  }
  func.func @transform_1(%arg0: i32) -> (i32, i32) {
    %c0_i32 = arith.constant 0 : i32
    %c0_i32_0 = arith.constant 0 : i32
    return %arg0, %c0_i32 : i32, i32
  }
  func.func @transform_2(%arg0: i32) -> (i32, i32) {
    %c0_i32 = arith.constant 0 : i32
    %c0_i32_0 = arith.constant 0 : i32
    %c0_i32_1 = arith.constant 0 : i32
    return %c0_i32, %c0_i32_0 : i32, i32
  }
  func.func @transform_3(%arg0: i32) -> (i32, i32) {
    %c0_i32 = arith.constant 0 : i32
    %c0_i32_0 = arith.constant 0 : i32
    %c0_i32_1 = arith.constant 0 : i32
    return %c0_i32, %c0_i32_0 : i32, i32
  }
  func.func @transform_4(%arg0: i32) -> (i32, i32) {
    %c0_i32 = arith.constant 0 : i32
    %c0_i32_0 = arith.constant 0 : i32
    return %arg0, %c0_i32 : i32, i32
  }
  func.func @transform_5(%arg0: i32) -> (i32, i32) {
    %c0_i32 = arith.constant 0 : i32
    %c0_i32_0 = arith.constant 0 : i32
    return %arg0, %c0_i32 : i32, i32
  }
}

</mosaic_0001>

<llo_original>
// kernel: planar_forward.1
$region0: #{planar_forward.1}
  #allocation0 [shape = 'u32[]', space=smem, size = 0x4, offset = 0x4, fixed_abs, tag = 'smem constant byte address 0x4 - core index']
  #allocation1 [shape = 'u32[72,128]{1,0:T(1,128)}', space=vmem, size = 0x9000, scoped, tag = 'internal scratch']
  %s0 = inlined_call_operand.vmem [shape: f32[2], index: 0, kind: input, shape index: {}]
  %s1 = inlined_call_operand.vmem [shape: f32[8,32], index: 1, kind: input, shape index: {}]
  %s2 = inlined_call_operand.vmem [shape: f32[1,32], index: 2, kind: input, shape index: {}]
  %s3 = inlined_call_operand.vmem [shape: f32[1,32], index: 3, kind: input, shape index: {}]
  %s4 = inlined_call_operand.hbm [shape: f32[8,32], index: 4, kind: output, shape index: {0}]
  %s5 = inlined_call_operand.vmem [shape: f32[8,1], index: 5, kind: output, shape index: {1}]
  %6 = xla_tuple %s4, %s5
  %s7 = sld [smem:[#allocation0]]
  $region38: #{planar_forward.1} parent=0
    _
  %s9 = ssub.s32 1, %s7
  %s10 = scalar_select 0, %s9, %s7
  $region1: #{planar_forward.1} parent=0
    #allocation2 [shape = 'u8[512]{0}', space=smem, size = 0x200, scoped, tag = 'input window, operand 0, single buffered']
    #allocation3 [shape = 's32[1]{0}', space=sflag, size = 0x4, scoped, tag = 'scoped memory for planar_forward.1']
    #allocation4 [shape = 's32[1]{0}', space=sflag, size = 0x4, scoped, tag = 'scoped memory for planar_forward.1']
    #allocation5 [shape = 'u8[4096]{0}', space=vmem, size = 0x1000, scoped, tag = 'output window, operand 0, single buffered']
    %11 = vsyncpa [#allocation4], 0
    %12 = vsyncpa [#allocation3], 0
    // Predicated region
    $region2: #{planar_forward.1} parent=1 // pred_check
      _
    $region3: #{planar_forward.1} parent=1 // pred_check_branch
      %14 = sbr.rel (0) target = $region5
    $region4: #{planar_forward.1} parent=1 // pred_region
      %16 = vsyncadd [#allocation4], 0
      %s18 = sshll.u32 %s0, 4
      %s19 = int_to_ptr.vmem [resolvable:$true] %s18
      %21 = dma.vmem_to_smem %s19, 16, [#allocation2], [#allocation4]
    $region5: #{planar_forward.1} parent=1 // pred_fallthru
      _
    // Predicated region
    $region6: #{planar_forward.1} parent=1 // pred_check
      _
    $region7: #{planar_forward.1} parent=1 // pred_check_branch
      %23 = sbr.rel (0) target = $region9
    $region8: #{planar_forward.1} parent=1 // pred_region
      _
    $region9: #{planar_forward.1} parent=1 // pred_fallthru
      _
    // Predicated region
    $region10: #{planar_forward.1} parent=1 // pred_check
      _
    $region11: #{planar_forward.1} parent=1 // pred_check_branch
      %25 = sbr.rel (0) target = $region13
    $region12: #{planar_forward.1} parent=1 // pred_region
      _
    $region13: #{planar_forward.1} parent=1 // pred_fallthru
      _
    // Predicated region
    $region14: #{planar_forward.1} parent=1 // pred_check
      _
    $region15: #{planar_forward.1} parent=1 // pred_check_branch
      %27 = sbr.rel (0) target = $region17
    $region16: #{planar_forward.1} parent=1 // pred_region
      _
    $region17: #{planar_forward.1} parent=1 // pred_fallthru
      _
    // Predicated region
    $region18: #{planar_forward.1} parent=1 // pred_check
      _
    $region19: #{planar_forward.1} parent=1 // pred_check_branch
      %29 = sbr.rel (0) target = $region21
    $region20: #{planar_forward.1} parent=1 // pred_region
      %31 = dma.done [#allocation4], 16
    $region21: #{planar_forward.1} parent=1 // pred_fallthru
      _
    %32 = sfence
    %s33 = sld [smem:[#allocation2]]
    %s34 = sld [smem:[#allocation2 + $0x1]]
    %v35 = vld [vmem:[%s1] sm:$0xff]
    %v36 = vld [vmem:[%s2] sm:$0x1]
    %v37 = vld [vmem:[%s3] sm:$0x1]
    %v39 = vperm.slane %v36, 0
    %v41 = vmul.f32 %v35, %v39
    %vm42 = vcmask 261120
    %v43 = vsel %vm42, %v41, 0.0
    %44 = vadd.xlane.f32.xlu0 %v43
    %v45 = vpop.xlane.xlu0 %44
    %v46 = vstv %s33
    %v47 = vadd.f32 %v45, %v46
    %v48 = vtanh.pop %v47
    %v50 = vperm.slane %v37, 0
    %v52 = vmul.f32 %v50, %v48
    %v53 = vadd.f32 %v35, %v52
    %54 = vst.msk [vmem:[#allocation5] sm:$0xff] %vm42, %v53
    %v55 = vmul.f32 %v48, %v48
    %v56 = vsub.f32 1.0, %v55
    %v57 = vstv %s34
    %v58 = vmul.f32 %v56, %v57
    %v59 = vadd.f32 %v58, 1.0
    %v60 = vand.u32 2147483647, %v59
    %v61 = vadd.f32 %v60, 1e-06
    %v62 = vlog2.pop %v61
    %v63 = vmul.f32 %v62, 0.6931472
    %vm64 = vcmask 7168
    %65 = vst.msk [vmem:[%s5] sm:$0xff] %vm64, %v63
    // Predicated region
    $region22: #{planar_forward.1} parent=1 // pred_check
      _
    $region23: #{planar_forward.1} parent=1 // pred_check_branch
      %67 = sbr.rel (0) target = $region25
    $region24: #{planar_forward.1} parent=1 // pred_region
      %69 = vsyncadd [#allocation3], 0
      %s71 = sshll.u32 [#allocation5], 4
      %s72 = int_to_ptr.vmem [resolvable:$true] %s71
      %s73 = sshll.u32 %s4, 4
      %s74 = int_to_ptr.hbm [resolvable:$true] %s73
      %76 = dma.vmem_to_hbm [thread:$0]  %s72, 128, %s74, [#allocation3]
    $region25: #{planar_forward.1} parent=1 // pred_fallthru
      _
    // Predicated region
    $region26: #{planar_forward.1} parent=1 // pred_check
      _
    $region27: #{planar_forward.1} parent=1 // pred_check_branch
      %78 = sbr.rel (0) target = $region29
    $region28: #{planar_forward.1} parent=1 // pred_region
      _
    $region29: #{planar_forward.1} parent=1 // pred_fallthru
      _
    // Predicated region
    $region30: #{planar_forward.1} parent=1 // pred_check
      _
    $region31: #{planar_forward.1} parent=1 // pred_check_branch
      %80 = sbr.rel (0) target = $region33
    $region32: #{planar_forward.1} parent=1 // pred_region
      %82 = dma.done [#allocation3], 128
    $region33: #{planar_forward.1} parent=1 // pred_fallthru
      _
    // Predicated region
    $region34: #{planar_forward.1} parent=1 // pred_check
      _
    $region35: #{planar_forward.1} parent=1 // pred_check_branch
      %84 = sbr.rel (0) target = $region37
    $region36: #{planar_forward.1} parent=1 // pred_region
      _
    $region37: #{planar_forward.1} parent=1 // pred_fallthru
      _
    %85 = vsyncpa [#allocation3], 1
    %86 = vsyncpa [#allocation4], 1

</llo_original>
